<compile_context>
chip_gen: v7x
topology: tpu7x:2x2x1
jax: 0.10.0
libtpu: 0.0.40
codegen_flags: <defaults>
</compile_context>

<pallas_src>
import functools

import jax
import jax.numpy as jnp
from jax.experimental import pallas as pl
from jax.experimental.pallas import tpu as pltpu


def _round_up(x, m):
    return ((x + m - 1) // m) * m


# ---------------------------------------------------------------------------
# Kernel 1: CLIP contrastive loss (single block, small B)
# ---------------------------------------------------------------------------
def clip_loss_kernel(scale_ref, img_ref, txt_ref, loss_ref):
    scale = scale_ref[0]
    img = img_ref[...]                               # native dtype (f32/bf16)
    txt = txt_ref[...]
    B = img.shape[0]

    # Native-dtype MXU matmuls with f32 accumulation; both softmaxes are
    # row-wise (lane-axis) reductions.
    sim_i = scale * jnp.dot(img, txt.T, preferred_element_type=jnp.float32)  # (B, B)
    sim_t = scale * jnp.dot(txt, img.T, preferred_element_type=jnp.float32)  # (B, B)

    def row_lse(s):
        m = jnp.max(s, axis=1, keepdims=True)
        return m + jnp.log(jnp.sum(jnp.exp(s - m), axis=1, keepdims=True))

    lse_i = row_lse(sim_i)                                                   # (B, 1)
    lse_t = row_lse(sim_t)                                                   # (B, 1)

    # Diagonal of both logit matrices == scale * <img_b, txt_b>; upcast only here.
    diag_sum = scale * jnp.sum(img.astype(jnp.float32) * txt.astype(jnp.float32))

    loss_i = jnp.sum(lse_i) - diag_sum
    loss_t = jnp.sum(lse_t) - diag_sum
    loss_ref[0, 0] = (loss_i + loss_t) / (2.0 * B)


def clip_contrastive_loss(image_features, text_features, logit_scale):
    B, D = image_features.shape
    scale = jnp.asarray(logit_scale, jnp.float32).reshape((1,))
    out = pl.pallas_call(
        clip_loss_kernel,
        out_shape=jax.ShapeDtypeStruct((1, 1), jnp.float32),
        in_specs=[
            pl.BlockSpec(memory_space=pltpu.MemorySpace.SMEM),   # logit_scale
            pl.BlockSpec((B, D), lambda: (0, 0)),                # image_features
            pl.BlockSpec((B, D), lambda: (0, 0)),                # text_features
        ],
        out_specs=pl.BlockSpec(memory_space=pltpu.MemorySpace.SMEM),
    )(scale, image_features, text_features)
    return out[0, 0]


# ---------------------------------------------------------------------------
# Kernel 2: caption (per-token) cross-entropy, tiled over (N, V) w/ online LSE
# ---------------------------------------------------------------------------
def caption_loss_kernel(logits_ref, labels_ref, loss_ref, cnt_ref,
                        m_sc, l_sc, p_sc, *, pad_id, tv):
    v = pl.program_id(1)
    nv = pl.num_programs(1)

    @pl.when(v == 0)
    def _init():
        m_sc[...] = jnp.full_like(m_sc, -jnp.inf)
        l_sc[...] = jnp.zeros_like(l_sc)
        p_sc[...] = jnp.zeros_like(p_sc)

    lg = logits_ref[...]                            # (TN, TV) native dtype
    lbl = labels_ref[...]                           # (TN, 1)  int32

    # Online log-sum-exp over the vocab axis.  The per-tile max runs in the
    # native (possibly narrow) dtype; only the exp/accumulate path is f32.
    tile_max = jnp.max(lg, axis=1, keepdims=True).astype(jnp.float32)
    m_prev = m_sc[...]
    m_new = jnp.maximum(m_prev, tile_max)
    alpha = jnp.exp(m_prev - m_new)
    l_sc[...] = alpha * l_sc[...] + jnp.sum(
        jnp.exp(lg.astype(jnp.float32) - m_new), axis=1, keepdims=True)
    m_sc[...] = m_new

    # Picked (target) logit: compare the tile-local (1, TV) iota against
    # (label - tile base); select in the native dtype (at most one hit/row,
    # so the narrow-dtype sum is exact), upcast only the (TN, 1) result.
    vocab_ids = jax.lax.broadcasted_iota(jnp.int32, (1, tv), 1)
    hit = vocab_ids == (lbl - v * tv)                                # (TN, TV)
    picked = jnp.sum(jnp.where(hit, lg, jnp.zeros_like(lg)), axis=1,
                     keepdims=True)
    p_sc[...] = p_sc[...] + picked.astype(jnp.float32)

    @pl.when(v == nv - 1)
    def _finalize():
        lse = m_sc[...] + jnp.log(l_sc[...])                         # (TN, 1)
        valid = (lbl != pad_id).astype(jnp.float32)                  # (TN, 1)
        per_tok = (lse - p_sc[...]) * valid
        # Lane-dense (8,128) partial blocks: loss sum and valid-token count.
        loss_ref[...] = jnp.full(loss_ref.shape, jnp.sum(per_tok), jnp.float32)
        cnt_ref[...] = jnp.full(cnt_ref.shape, jnp.sum(valid), jnp.float32)


def caption_cross_entropy(logits, labels, pad_id=0, tn=256, tv=8192):
    """Mean per-token CE with ignore_index=pad_id. logits: (B,T,V), labels: (B,T)."""
    assert tn % 8 == 0 and tv % 128 == 0
    B, T, V = logits.shape
    N = B * T
    logits2d = logits.reshape(N, V)
    labels2d = labels.reshape(N, 1).astype(jnp.int32)
    itemsize = jnp.dtype(logits2d.dtype).itemsize

    # --- tile selection -----------------------------------------------------
    TN = min(tn, _round_up(N, 8))
    TV = min(tv, _round_up(V, 128))
    # Guarantee >= 2 row tiles whenever possible so the "parallel" N axis can
    # shard across both TensorCores on v7x (harmless on single-TC chips).
    if _round_up(N, 8) >= 16:
        TN = min(TN, _round_up(pl.cdiv(N, 2), 8))

    # VMEM peak estimate: double-buffered logits tile + ~3 full-tile f32
    # temporaries (upcast / exp / select) + lane-padded small buffers.
    def _peak(tn_, tv_):
        return (2 * tn_ * tv_ * itemsize          # logits tile, 2 pipeline bufs
                + 3 * tn_ * tv_ * 4               # in-kernel f32 temporaries
                + 2 * tn_ * 128 * 4               # labels tile (lane-padded), 2 bufs
                + 3 * tn_ * 128 * 4               # m/l/p scratch (lane-padded)
                + 2 * 2 * 8 * 128 * 4)            # two (8,128) outputs, 2 bufs

    # Generation-aware VMEM cap (v5e/v6e: 128 MiB, v7x: 64 MiB per TC).
    try:
        physical_vmem = int(pltpu.get_tpu_info().vmem_capacity_bytes)
    except Exception:  # conservative fallback: smallest current generation
        physical_vmem = 64 * 1024 * 1024
    vmem_cap = int(0.8 * physical_vmem)

    # Shrink tiles until the estimated peak fits under the cap.
    while _peak(TN, TV) > vmem_cap and TV > 128:
        TV = max(128, 128 * ((TV // 2) // 128))
    while _peak(TN, TV) > vmem_cap and TN > 8:
        TN = max(8, 8 * ((TN // 2) // 8))

    Np = _round_up(N, TN)
    Vp = _round_up(V, TV)

    # Pad remainders: padded rows get pad_id labels (ignored), padded vocab
    # columns get -1e30 (exp underflows to 0; never selected by real labels).
    if Np != N:
        logits2d = jnp.pad(logits2d, ((0, Np - N), (0, 0)))
        labels2d = jnp.pad(labels2d, ((0, Np - N), (0, 0)),
                           constant_values=pad_id)
    if Vp != V:
        logits2d = jnp.pad(logits2d, ((0, 0), (0, Vp - V)),
                           constant_values=-1e30)

    nN = Np // TN
    nV = Vp // TV

    # Always set the scoped-VMEM limit explicitly (v5e default is only 16 MiB),
    # with a floor for tiny tiles and capped at 0.8x physical VMEM.
    vmem_limit = int(min(vmem_cap,
                         max(_peak(TN, TV) + (1 << 20), 16 * 1024 * 1024)))

    cost = pl.CostEstimate(
        flops=int(6 * Np * Vp),
        transcendentals=int(Np * Vp),
        bytes_accessed=int(Np * Vp * itemsize + Np * 4 + 2 * nN * 8 * 128 * 4),
    )

    kernel = functools.partial(caption_loss_kernel, pad_id=pad_id, tv=TV)

    loss_p, cnt_p = pl.pallas_call(
        kernel,
        grid=(nN, nV),
        out_shape=(
            jax.ShapeDtypeStruct((nN * 8, 128), jnp.float32),
            jax.ShapeDtypeStruct((nN * 8, 128), jnp.float32),
        ),
        in_specs=[
            pl.BlockSpec((TN, TV), lambda i, v: (i, v)),   # logits tile
            pl.BlockSpec((TN, 1), lambda i, v: (i, 0)),    # labels (resident over v)
        ],
        out_specs=(
            pl.BlockSpec((8, 128), lambda i, v: (i, 0)),   # loss partials
            pl.BlockSpec((8, 128), lambda i, v: (i, 0)),   # count partials
        ),
        scratch_shapes=[
            pltpu.VMEM((TN, 1), jnp.float32),   # running max
            pltpu.VMEM((TN, 1), jnp.float32),   # running sum(exp)
            pltpu.VMEM((TN, 1), jnp.float32),   # picked target logit
        ],
        compiler_params=pltpu.CompilerParams(
            dimension_semantics=("parallel", "arbitrary"),
            vmem_limit_bytes=vmem_limit,
        ),
        cost_estimate=cost,
    )(logits2d, labels2d)

    loss_sum = jnp.sum(loss_p[::8, 0])
    valid_sum = jnp.sum(cnt_p[::8, 0])
    # NOTE: PyTorch CrossEntropyLoss(ignore_index=...) yields NaN when every
    # token is ignored; we clamp the denominator to 1 (returns 0) instead.
    return loss_sum / jnp.maximum(valid_sum, 1.0)


# ---------------------------------------------------------------------------
# CoCaLoss wrapper (world_size = 1)
# ---------------------------------------------------------------------------
def coca_loss(image_features, text_features, logits, labels, logit_scale,
              caption_loss_weight=2.0, clip_loss_weight=1.0, pad_id=0,
              tn=256, tv=8192):
    if clip_loss_weight:
        clip_l = clip_loss_weight * clip_contrastive_loss(
            image_features, text_features, logit_scale)
    else:
        clip_l = jnp.asarray(0.0, jnp.float32)
    cap_l = caption_loss_weight * caption_cross_entropy(
        logits, labels, pad_id=pad_id, tn=tn, tv=tv)
    return clip_l, cap_l


# ---------------------------------------------------------------------------
# Pure-JAX reference (silent correctness check)
# ---------------------------------------------------------------------------
def _reference(image_features, text_features, logits, labels, logit_scale,
               caption_loss_weight=2.0, clip_loss_weight=1.0, pad_id=0):
    B = image_features.shape[0]
    sim = logit_scale * image_features @ text_features.T
    lp_i = jax.nn.log_softmax(sim, axis=1)
    lp_t = jax.nn.log_softmax(sim.T, axis=1)
    ce_i = -jnp.mean(lp_i[jnp.arange(B), jnp.arange(B)])
    ce_t = -jnp.mean(lp_t[jnp.arange(B), jnp.arange(B)])
    clip_l = clip_loss_weight * (ce_i + ce_t) / 2.0

    Bt, T, V = logits.shape
    lg = logits.reshape(Bt * T, V)
    lb = labels.reshape(Bt * T)
    lp = jax.nn.log_softmax(lg, axis=1)
    nll = -lp[jnp.arange(Bt * T), lb]
    valid = (lb != pad_id).astype(jnp.float32)
    cap_l = caption_loss_weight * jnp.sum(nll * valid) / jnp.maximum(
        jnp.sum(valid), 1.0)
    return clip_l, cap_l


if __name__ == "__main__":
    key = jax.random.PRNGKey(0)
    k1, k2, k3, k4 = jax.random.split(key, 4)

    # Small shapes; V and N deliberately NOT tile-aligned to exercise the
    # tiled/padded path.
    B, D = 8, 128        # batch, embedding dim
    T, V = 8, 300        # caption length, vocab size
    pad_id = 0
    caption_loss_weight = 2.0
    clip_loss_weight = 1.0

    img = jax.random.normal(k1, (B, D), dtype=jnp.float32)
    txt = jax.random.normal(k2, (B, D), dtype=jnp.float32)
    img = img / jnp.linalg.norm(img, axis=-1, keepdims=True)
    txt = txt / jnp.linalg.norm(txt, axis=-1, keepdims=True)

    logits = jax.random.normal(k3, (B, T, V), dtype=jnp.float32)
    labels = jax.random.randint(k4, (B, T), 0, V, dtype=jnp.int32)
    labels = labels.at[:, -1].set(pad_id)   # ensure some ignored tokens

    logit_scale = jnp.exp(jnp.asarray(2.0, jnp.float32))

    ref_clip, ref_cap = _reference(img, txt, logits, labels, logit_scale,
                                   caption_loss_weight, clip_loss_weight,
                                   pad_id)

    # 1) Explicit small tiles: exercises remainder padding (nN=3, nV=3).
    clip_l, cap_l = coca_loss(img, txt, logits, labels, logit_scale,
                              caption_loss_weight=caption_loss_weight,
                              clip_loss_weight=clip_loss_weight,
                              pad_id=pad_id, tn=24, tv=128)
    clip_l = jax.block_until_ready(clip_l)
    cap_l = jax.block_until_ready(cap_l)
    assert jnp.allclose(clip_l, ref_clip, rtol=1e-4, atol=1e-4), (clip_l, ref_clip)
    assert jnp.allclose(cap_l, ref_cap, rtol=1e-4, atol=1e-4), (cap_l, ref_cap)

    # 2) Default (auto-sized) tiles: single V tile, >= 2 N tiles (dual-TC path).
    clip_l2, cap_l2 = coca_loss(img, txt, logits, labels, logit_scale,
                                caption_loss_weight=caption_loss_weight,
                                clip_loss_weight=clip_loss_weight,
                                pad_id=pad_id)
    clip_l2 = jax.block_until_ready(clip_l2)
    cap_l2 = jax.block_until_ready(cap_l2)
    assert jnp.allclose(clip_l2, ref_clip, rtol=1e-4, atol=1e-4), (clip_l2, ref_clip)
    assert jnp.allclose(cap_l2, ref_cap, rtol=1e-4, atol=1e-4), (cap_l2, ref_cap)

    # 3) bf16 logits path (halves HBM traffic of the HBM-bound caption kernel);
    #    reference computed on the same bf16-rounded values so only kernel
    #    accumulation error remains.
    logits_bf16 = logits.astype(jnp.bfloat16)
    cap_bf16 = caption_cross_entropy(logits_bf16, labels, pad_id=pad_id)
    cap_bf16 = jax.block_until_ready(cap_bf16)
    _, ref_cap_bf16 = _reference(img, txt, logits_bf16.astype(jnp.float32),
                                 labels, logit_scale, 1.0, 0.0, pad_id)
    assert jnp.allclose(cap_bf16, ref_cap_bf16, rtol=1e-3, atol=1e-3), (
        cap_bf16, ref_cap_bf16)

    print("KERNEL_OK")
</pallas_src>

<mosaic_0001>
module attributes {stable_mosaic.version = 11 : i64} {
  func.func @clip_loss_kernel(%arg0: memref<1xf32, #tpu.memory_space<smem>>, %arg1: memref<8x128xf32, #tpu.memory_space<vmem>>, %arg2: memref<8x128xf32, #tpu.memory_space<vmem>>, %arg3: memref<1x1xf32, #tpu.memory_space<smem>>) attributes {dimension_semantics = [], scalar_prefetch = 0 : i64, scratch_operands = 0 : i64, tpu.core_type = #tpu.core_type<tc>} {
    %c0 = arith.constant 0 : index
    %0 = memref.load %arg0[%c0] : memref<1xf32, #tpu.memory_space<smem>>
    %c0_0 = arith.constant 0 : index
    %c0_1 = arith.constant 0 : index
    %1 = vector.load %arg1[%c0_0, %c0_1] : memref<8x128xf32, #tpu.memory_space<vmem>>, vector<8x128xf32>
    %c0_2 = arith.constant 0 : index
    %c0_3 = arith.constant 0 : index
    %2 = vector.load %arg2[%c0_2, %c0_3] : memref<8x128xf32, #tpu.memory_space<vmem>>, vector<8x128xf32>
    %3 = tpu.transpose %2, [1, 0] : vector<8x128xf32> -> vector<128x8xf32>
    %cst = arith.constant dense<0.000000e+00> : vector<8x8xf32>
    %4 = tpu.matmul %1, %3, %cst {dimension_numbers = #tpu.dot_dimension_numbers<[1], [0], [0], [1], [0, 0, 1, 1], [], []>} : vector<8x128xf32>, vector<128x8xf32>, vector<8x8xf32> -> vector<8x8xf32>
    %5 = vector.broadcast %0 : f32 to vector<8x8xf32>
    %6 = arith.mulf %5, %4 : vector<8x8xf32>
    %7 = tpu.transpose %1, [1, 0] : vector<8x128xf32> -> vector<128x8xf32>
    %cst_4 = arith.constant dense<0.000000e+00> : vector<8x8xf32>
    %8 = tpu.matmul %2, %7, %cst_4 {dimension_numbers = #tpu.dot_dimension_numbers<[1], [0], [0], [1], [0, 0, 1, 1], [], []>} : vector<8x128xf32>, vector<128x8xf32>, vector<8x8xf32> -> vector<8x8xf32>
    %9 = vector.broadcast %0 : f32 to vector<8x8xf32>
    %10 = arith.mulf %9, %8 : vector<8x8xf32>
    %cst_5 = arith.constant dense<0xFF800000> : vector<8xf32>
    %11 = vector.multi_reduction <maximumf>, %6, %cst_5 [1] : vector<8x8xf32> to vector<8xf32>
    %12 = vector.shape_cast %11 : vector<8xf32> to vector<8x1xf32>
    %13 = vector.broadcast %12 : vector<8x1xf32> to vector<8x8xf32>
    %14 = arith.subf %6, %13 : vector<8x8xf32>
    %15 = math.exp %14 : vector<8x8xf32>
    %cst_6 = arith.constant dense<0.000000e+00> : vector<8xf32>
    %16 = vector.multi_reduction <add>, %15, %cst_6 [1] : vector<8x8xf32> to vector<8xf32>
    %17 = vector.shape_cast %16 : vector<8xf32> to vector<8x1xf32>
    %18 = math.log %17 : vector<8x1xf32>
    %19 = arith.addf %12, %18 : vector<8x1xf32>
    %cst_7 = arith.constant dense<0xFF800000> : vector<8xf32>
    %20 = vector.multi_reduction <maximumf>, %10, %cst_7 [1] : vector<8x8xf32> to vector<8xf32>
    %21 = vector.shape_cast %20 : vector<8xf32> to vector<8x1xf32>
    %22 = vector.broadcast %21 : vector<8x1xf32> to vector<8x8xf32>
    %23 = arith.subf %10, %22 : vector<8x8xf32>
    %24 = math.exp %23 : vector<8x8xf32>
    %cst_8 = arith.constant dense<0.000000e+00> : vector<8xf32>
    %25 = vector.multi_reduction <add>, %24, %cst_8 [1] : vector<8x8xf32> to vector<8xf32>
    %26 = vector.shape_cast %25 : vector<8xf32> to vector<8x1xf32>
    %27 = math.log %26 : vector<8x1xf32>
    %28 = arith.addf %21, %27 : vector<8x1xf32>
    %29 = arith.mulf %1, %2 : vector<8x128xf32>
    %30 = vector.shape_cast %29 : vector<8x128xf32> to vector<1x8x128xf32>
    %cst_9 = arith.constant dense<0.000000e+00> : vector<1xf32>
    %31 = vector.multi_reduction <add>, %30, %cst_9 [1, 2] : vector<1x8x128xf32> to vector<1xf32>
    %32 = vector.shape_cast %31 : vector<1xf32> to vector<1x1x1xf32>
    %33 = vector.extract %32[0, 0, 0] : f32 from vector<1x1x1xf32>
    %34 = arith.mulf %0, %33 : f32
    %35 = vector.shape_cast %19 : vector<8x1xf32> to vector<1x8x1xf32>
    %cst_10 = arith.constant dense<0.000000e+00> : vector<1xf32>
    %36 = vector.multi_reduction <add>, %35, %cst_10 [1, 2] : vector<1x8x1xf32> to vector<1xf32>
    %37 = vector.shape_cast %36 : vector<1xf32> to vector<1x1x1xf32>
    %38 = vector.extract %37[0, 0, 0] : f32 from vector<1x1x1xf32>
    %39 = arith.subf %38, %34 : f32
    %40 = vector.shape_cast %28 : vector<8x1xf32> to vector<1x8x1xf32>
    %cst_11 = arith.constant dense<0.000000e+00> : vector<1xf32>
    %41 = vector.multi_reduction <add>, %40, %cst_11 [1, 2] : vector<1x8x1xf32> to vector<1xf32>
    %42 = vector.shape_cast %41 : vector<1xf32> to vector<1x1x1xf32>
    %43 = vector.extract %42[0, 0, 0] : f32 from vector<1x1x1xf32>
    %44 = arith.subf %43, %34 : f32
    %45 = arith.addf %39, %44 : f32
    %cst_12 = arith.constant 1.600000e+01 : f32
    %46 = arith.divf %45, %cst_12 : f32
    %c0_13 = arith.constant 0 : index
    %c0_14 = arith.constant 0 : index
    %47 = memref.load %arg3[%c0_13, %c0_14] : memref<1x1xf32, #tpu.memory_space<smem>>
    memref.store %46, %arg3[%c0_13, %c0_14] : memref<1x1xf32, #tpu.memory_space<smem>>
    return
  }
}

</mosaic_0001>

<llo_original>
// kernel: tpu_custom_call.1
$region0: #{tpu_custom_call.1}
  #allocation0 [shape = 'u32[]', space=smem, size = 0x4, offset = 0x4, fixed_abs, tag = 'smem constant byte address 0x4 - core index']
  #allocation1 [shape = 'u32[144,128]{1,0:T(1,128)}', space=vmem, size = 0x12000, scoped, tag = 'internal scratch']
  #allocation2 [shape = 'f32[1]{0:T(128)S(6)}', space=smem, size = 0x200, scoped, tag = 'scoped memory for tpu_custom_call.1']
  %s0 = inlined_call_operand.<no memory space> [shape: f32[1], index: 0, kind: input, shape index: {}]
  %s1 = inlined_call_operand.hbm [shape: f32[8,128], index: 1, kind: input, shape index: {}]
  %s2 = inlined_call_operand.hbm [shape: f32[8,128], index: 2, kind: input, shape index: {}]
  %s3 = inlined_call_operand.hbm [shape: f32[1,1], index: 3, kind: output, shape index: {}]
  %s4 = sld [smem:[#allocation0]]
  $region30: #{tpu_custom_call.1} parent=0
    _
  %s6 = ssub.s32 1, %s4
  %s7 = scalar_select 0, %s6, %s4
  %8 = sst [smem:[#allocation2]] %s0
  $region1: #{tpu_custom_call.1} parent=0
    #allocation3 [shape = 'u8[4096]{0}', space=vmem, size = 0x1000, scoped, tag = 'input window, operand 1, single buffered']
    #allocation4 [shape = 's32[1]{0}', space=sflag, size = 0x4, scoped, tag = 'scoped memory for tpu_custom_call.1']
    #allocation5 [shape = 's32[1]{0}', space=sflag, size = 0x4, scoped, tag = 'scoped memory for tpu_custom_call.1']
    #allocation6 [shape = 'u8[4096]{0}', space=vmem, size = 0x1000, scoped, tag = 'input window, operand 2, single buffered']
    #allocation7 [shape = 's32[1]{0}', space=sflag, size = 0x4, scoped, tag = 'scoped memory for tpu_custom_call.1']
    #allocation8 [shape = 'u8[512]{0}', space=smem, size = 0x200, scoped, tag = 'output window, operand 0, single buffered']
    %9 = vsyncpa [#allocation4], 0
    %10 = vsyncpa [#allocation7], 0
    %11 = vsyncpa [#allocation5], 0
    // Predicated region
    $region2: #{tpu_custom_call.1} parent=1 // pred_check
      _
    $region3: #{tpu_custom_call.1} parent=1 // pred_check_branch
      %13 = sbr.rel (0) target = $region5
    $region4: #{tpu_custom_call.1} parent=1 // pred_region
      _
    $region5: #{tpu_custom_call.1} parent=1 // pred_fallthru
      _
    // Predicated region
    $region6: #{tpu_custom_call.1} parent=1 // pred_check
      _
    $region7: #{tpu_custom_call.1} parent=1 // pred_check_branch
      %15 = sbr.rel (0) target = $region9
    $region8: #{tpu_custom_call.1} parent=1 // pred_region
      %s17 = ssub.s32 128, 128
      %18 = vsyncadd [#allocation4], %s17
      %s20 = sshll.u32 [#allocation3], 4
      %s21 = int_to_ptr.vmem [resolvable:$true] %s20
      %23 = dma.hbm_to_vmem [thread:$0]  %s1, 128, %s21, [#allocation4]
    $region9: #{tpu_custom_call.1} parent=1 // pred_fallthru
      _
    // Predicated region
    $region10: #{tpu_custom_call.1} parent=1 // pred_check
      _
    $region11: #{tpu_custom_call.1} parent=1 // pred_check_branch
      %25 = sbr.rel (0) target = $region13
    $region12: #{tpu_custom_call.1} parent=1 // pred_region
      %s27 = ssub.s32 128, 128
      %28 = vsyncadd [#allocation7], %s27
      %s30 = sshll.u32 [#allocation6], 4
      %s31 = int_to_ptr.vmem [resolvable:$true] %s30
      %33 = dma.hbm_to_vmem [thread:$0]  %s2, 128, %s31, [#allocation7]
    $region13: #{tpu_custom_call.1} parent=1 // pred_fallthru
      _
    // Predicated region
    $region14: #{tpu_custom_call.1} parent=1 // pred_check
      _
    $region15: #{tpu_custom_call.1} parent=1 // pred_check_branch
      %35 = sbr.rel (0) target = $region17
    $region16: #{tpu_custom_call.1} parent=1 // pred_region
      %36 = dma.done [#allocation4], 128
    $region17: #{tpu_custom_call.1} parent=1 // pred_fallthru
      _
    // Predicated region
    $region18: #{tpu_custom_call.1} parent=1 // pred_check
      _
    $region19: #{tpu_custom_call.1} parent=1 // pred_check_branch
      %38 = sbr.rel (0) target = $region21
    $region20: #{tpu_custom_call.1} parent=1 // pred_region
      %39 = dma.done [#allocation7], 128
    $region21: #{tpu_custom_call.1} parent=1 // pred_fallthru
      _
    %s40 = sld [smem:[#allocation2]]
    %v41 = vld [vmem:[#allocation3] sm:$0xff]
    %v42 = vld [vmem:[#allocation6] sm:$0xff]
    %43 = vmatprep.subr.mxu0 0.0
    %44 = vmatpush1.xpose.msra.mxu0 %v42
    %45 = vmatprep.subr.mxu0 0.0
    %46 = vmatpush1.xpose.msra.mxu0 0.0
    %47 = vmatprep.subr.mxu0 0.0
    %48 = vmatpush1.xpose.msra.mxu0 0.0
    %49 = vmatprep.subr.mxu0 0.0
    %50 = vmatpush1.xpose.msra.mxu0 0.0
    %51 = vmatprep.subr.mxu0 0.0
    %52 = vmatpush1.xpose.msra.mxu0 0.0
    %53 = vmatprep.subr.mxu0 0.0
    %54 = vmatpush1.xpose.msra.mxu0 0.0
    %55 = vmatprep.subr.mxu0 0.0
    %56 = vmatpush1.xpose.msra.mxu0 0.0
    %57 = vmatprep.subr.mxu0 0.0
    %58 = vmatpush1.xpose.msra.mxu0 0.0
    %59 = vmatprep.subr.mxu0 0.0
    %60 = vmatpush1.xpose.msra.mxu0 0.0
    %61 = vmatprep.subr.mxu0 0.0
    %62 = vmatpush1.xpose.msra.mxu0 0.0
    %63 = vmatprep.subr.mxu0 0.0
    %64 = vmatpush1.xpose.msra.mxu0 0.0
    %65 = vmatprep.subr.mxu0 0.0
    %66 = vmatpush1.xpose.msra.mxu0 0.0
    %67 = vmatprep.subr.mxu0 0.0
    %68 = vmatpush1.xpose.msra.mxu0 0.0
    %69 = vmatprep.subr.mxu0 0.0
    %70 = vmatpush1.xpose.msra.mxu0 0.0
    %71 = vmatprep.subr.mxu0 0.0
    %72 = vmatpush1.xpose.msra.mxu0 0.0
    %73 = vmatprep.subr.mxu0 0.0
    %74 = vmatpush1.xpose.msra.mxu0 0.0
    %75 = vmatprep.subr.mxu0 0.0
    %76 = vmatpush1.xpose.msra.mxu0 0.0
    %77 = vmatprep.subr.mxu0 0.0
    %78 = vmatpush1.xpose.msra.mxu0 0.0
    %79 = vmatprep.subr.mxu0 0.0
    %80 = vmatpush1.xpose.msra.mxu0 0.0
    %81 = vmatprep.subr.mxu0 0.0
    %82 = vmatpush1.xpose.msra.mxu0 0.0
    %83 = vmatprep.subr.mxu0 0.0
    %84 = vmatpush1.xpose.msra.mxu0 0.0
    %85 = vmatprep.subr.mxu0 0.0
    %86 = vmatpush1.xpose.msra.mxu0 0.0
    %87 = vmatprep.subr.mxu0 0.0
    %88 = vmatpush1.xpose.msra.mxu0 0.0
    %89 = vmatprep.subr.mxu0 0.0
    %90 = vmatpush1.xpose.msra.mxu0 0.0
    %91 = vmatprep.subr.mxu0 0.0
    %92 = vmatpush1.xpose.msra.mxu0 0.0
    %93 = vmatprep.subr.mxu0 0.0
    %94 = vmatpush1.xpose.msra.mxu0 0.0
    %95 = vmatprep.subr.mxu0 0.0
    %96 = vmatpush1.xpose.msra.mxu0 0.0
    %97 = vmatprep.subr.mxu0 0.0
    %98 = vmatpush1.xpose.msra.mxu0 0.0
    %99 = vmatprep.subr.mxu0 0.0
    %100 = vmatpush1.xpose.msra.mxu0 0.0
    %101 = vmatprep.subr.mxu0 0.0
    %102 = vmatpush1.xpose.msra.mxu0 0.0
    %103 = vmatprep.subr.mxu0 0.0
    %104 = vmatpush1.xpose.msra.mxu0 0.0
    %105 = vmatprep.subr.mxu0 0.0
    %106 = vmatpush1.xpose.msra.mxu0 0.0
    %107 = vmatprep.mubr.f32.mxu0 0.0
    %108 = vmatmul.mubr.f32.gmra.mrb[0].mxu0 %v41
    %v109 = vpop.f32.mrb[0].mxu0
    %v110 = vadd.f32 0.0, %v109
    %v111 = vpop.f32.mrb[0].mxu0
    %112 = vdwg.mxu0
    %v113 = vstv %s40
    %v114 = vmul.f32 %v113, %v110
    %115 = vmatprep.subr.mxu0 0.0
    %116 = vmatpush1.xpose.msra.mxu0 %v41
    %117 = vmatprep.subr.mxu0 0.0
    %118 = vmatpush1.xpose.msra.mxu0 0.0
    %119 = vmatprep.subr.mxu0 0.0
    %120 = vmatpush1.xpose.msra.mxu0 0.0
    %121 = vmatprep.subr.mxu0 0.0
    %122 = vmatpush1.xpose.msra.mxu0 0.0
    %123 = vmatprep.subr.mxu0 0.0
    %124 = vmatpush1.xpose.msra.mxu0 0.0
    %125 = vmatprep.subr.mxu0 0.0
    %126 = vmatpush1.xpose.msra.mxu0 0.0
    %127 = vmatprep.subr.mxu0 0.0
    %128 = vmatpush1.xpose.msra.mxu0 0.0
    %129 = vmatprep.subr.mxu0 0.0
    %130 = vmatpush1.xpose.msra.mxu0 0.0
    %131 = vmatprep.subr.mxu0 0.0
    %132 = vmatpush1.xpose.msra.mxu0 0.0
    %133 = vmatprep.subr.mxu0 0.0
    %134 = vmatpush1.xpose.msra.mxu0 0.0
    %135 = vmatprep.subr.mxu0 0.0
    %136 = vmatpush1.xpose.msra.mxu0 0.0
    %137 = vmatprep.subr.mxu0 0.0
    %138 = vmatpush1.xpose.msra.mxu0 0.0
    %139 = vmatprep.subr.mxu0 0.0
    %140 = vmatpush1.xpose.msra.mxu0 0.0
    %141 = vmatprep.subr.mxu0 0.0
    %142 = vmatpush1.xpose.msra.mxu0 0.0
    %143 = vmatprep.subr.mxu0 0.0
    %144 = vmatpush1.xpose.msra.mxu0 0.0
    %145 = vmatprep.subr.mxu0 0.0
    %146 = vmatpush1.xpose.msra.mxu0 0.0
    %147 = vmatprep.subr.mxu0 0.0
    %148 = vmatpush1.xpose.msra.mxu0 0.0
    %149 = vmatprep.subr.mxu0 0.0
    %150 = vmatpush1.xpose.msra.mxu0 0.0
    %151 = vmatprep.subr.mxu0 0.0
    %152 = vmatpush1.xpose.msra.mxu0 0.0
    %153 = vmatprep.subr.mxu0 0.0
    %154 = vmatpush1.xpose.msra.mxu0 0.0
    %155 = vmatprep.subr.mxu0 0.0
    %156 = vmatpush1.xpose.msra.mxu0 0.0
    %157 = vmatprep.subr.mxu0 0.0
    %158 = vmatpush1.xpose.msra.mxu0 0.0
    %159 = vmatprep.subr.mxu0 0.0
    %160 = vmatpush1.xpose.msra.mxu0 0.0
    %161 = vmatprep.subr.mxu0 0.0
    %162 = vmatpush1.xpose.msra.mxu0 0.0
    %163 = vmatprep.subr.mxu0 0.0
    %164 = vmatpush1.xpose.msra.mxu0 0.0
    %165 = vmatprep.subr.mxu0 0.0
    %166 = vmatpush1.xpose.msra.mxu0 0.0
    %167 = vmatprep.subr.mxu0 0.0
    %168 = vmatpush1.xpose.msra.mxu0 0.0
    %169 = vmatprep.subr.mxu0 0.0
    %170 = vmatpush1.xpose.msra.mxu0 0.0
    %171 = vmatprep.subr.mxu0 0.0
    %172 = vmatpush1.xpose.msra.mxu0 0.0
    %173 = vmatprep.subr.mxu0 0.0
    %174 = vmatpush1.xpose.msra.mxu0 0.0
    %175 = vmatprep.subr.mxu0 0.0
    %176 = vmatpush1.xpose.msra.mxu0 0.0
    %177 = vmatprep.subr.mxu0 0.0
    %178 = vmatpush1.xpose.msra.mxu0 0.0
    %179 = vmatprep.mubr.f32.mxu0 0.0
    %180 = vmatmul.mubr.f32.gmra.mrb[0].mxu0 %v42
    %v181 = vpop.f32.mrb[0].mxu0
    %v182 = vadd.f32 0.0, %v181
    %v183 = vpop.f32.mrb[0].mxu0
    %184 = vdwg.mxu0
    %v185 = vmul.f32 %v113, %v182
    %vm186 = vcmask 64512
    %v187 = vsel %vm186, %v114, -inf
    %188 = vmax.xlane.f32.xlu0 %v187
    %v189 = vpop.xlane.xlu0 %188
    %v190 = vsub.f32 %v114, %v189
    %v191 = vmul.f32 %v190, 1.442695
    %v192 = vpow.pop %v191
    %v193 = vsel %vm186, %v192, 0.0
    %194 = vadd.xlane.f32.xlu0 %v193
    %v195 = vpop.xlane.xlu0 %194
    %v196 = vlog2.pop %v195
    %v197 = vmul.f32 %v196, 0.6931472
    %v198 = vadd.f32 %v189, %v197
    %v199 = vsel %vm186, %v185, -inf
    %200 = vmax.xlane.f32.xlu0 %v199
    %v201 = vpop.xlane.xlu0 %200
    %v202 = vsub.f32 %v185, %v201
    %v203 = vmul.f32 %v202, 1.442695
    %v204 = vpow.pop %v203
    %v205 = vsel %vm186, %v204, 0.0
    %206 = vadd.xlane.f32.xlu0 %v205
    %v207 = vpop.xlane.xlu0 %206
    %v208 = vlog2.pop %v207
    %v209 = vmul.f32 %v208, 0.6931472
    %v210 = vadd.f32 %v201, %v209
    %v211 = vmul.f32 %v41, %v42
    %212 = vadd.xlane.f32.xlu0 %v211
    %v213 = vpop.xlane.xlu0 %212
    %v214 = vrot.slane %v213, 4
    %v215 = vadd.f32 %v213, %v214
    %v216 = vrot.slane %v215, 2
    %v217 = vadd.f32 %v215, %v216
    %v218 = vrot.slane %v217, 1
    %v219 = vadd.f32 %v217, %v218
    %s220 = vtos %v219
    %s221 = smul.f32 %s40, %s220
    %vm222 = vcmask 7168
    %v223 = vsel %vm222, %v198, 0.0
    %224 = vadd.xlane.f32.xlu0 %v223
    %v225 = vpop.xlane.xlu0 %224
    %v226 = vrot.slane %v225, 4
    %v227 = vadd.f32 %v225, %v226
    %v228 = vrot.slane %v227, 2
    %v229 = vadd.f32 %v227, %v228
    %v230 = vrot.slane %v229, 1
    %v231 = vadd.f32 %v229, %v230
    %s232 = vtos %v231
    %s233 = ssub.f32 %s232, %s221
    %v234 = vsel %vm222, %v210, 0.0
    %235 = vadd.xlane.f32.xlu0 %v234
    %v236 = vpop.xlane.xlu0 %235
    %v237 = vrot.slane %v236, 4
    %v238 = vadd.f32 %v236, %v237
    %v239 = vrot.slane %v238, 2
    %v240 = vadd.f32 %v238, %v239
    %v241 = vrot.slane %v240, 1
    %v242 = vadd.f32 %v240, %v241
    %s243 = vtos %v242
    %s244 = ssub.f32 %s243, %s221
    %s245 = sadd.f32 %s233, %s244
    %v246 = vrcp.pop 16.0
    %s247 = vtos %v246
    %s248 = smul.f32 %s245, %s247
    %s249 = scalar_lea.smem [#allocation8], 0
    %250 = sst [smem:[%s249]] %s248
    // Predicated region
    $region22: #{tpu_custom_call.1} parent=1 // pred_check
      _
    $region23: #{tpu_custom_call.1} parent=1 // pred_check_branch
      %252 = sbr.rel (0) target = $region25
    $region24: #{tpu_custom_call.1} parent=1 // pred_region
      %s254 = ssub.s32 16, 16
      %255 = vsyncadd [#allocation5], %s254
      %258 = dma.smem_to_hbm [#allocation8], 16, %s3, [#allocation5]
    $region25: #{tpu_custom_call.1} parent=1 // pred_fallthru
      _
    // Predicated region
    $region26: #{tpu_custom_call.1} parent=1 // pred_check
      _
    $region27: #{tpu_custom_call.1} parent=1 // pred_check_branch
      %260 = sbr.rel (0) target = $region29
    $region28: #{tpu_custom_call.1} parent=1 // pred_region
      %261 = dma.done [#allocation5], 16
    $region29: #{tpu_custom_call.1} parent=1 // pred_fallthru
      _
    %262 = sfence
    %263 = vsyncpa [#allocation4], 1
    %264 = vsyncpa [#allocation7], 1
    %265 = vsyncpa [#allocation5], 1

</llo_original>
